<compile_context>
chip_gen: v7x
topology: tpu7x:2x2x1
jax: 0.10.0
libtpu: 0.0.40
codegen_flags: <defaults>
</compile_context>

<pallas_src>
import math

import jax
import jax.numpy as jnp
from jax import lax
from jax.experimental import pallas as pl
from jax.experimental.pallas import tpu as pltpu

_LANE = 128               # lanes per vreg == batch elements per packed row
_PAIR = 2 * _LANE         # 256 flat f32 elements per packed row (features interleaved)
_SUB = 8                  # sublane granularity (row-tile multiple)
_MAX_TILE_ROWS = 2048     # (2048,256)+(2048,128) f32 ~3 MiB/step, ~6 MiB double-buffered


def _hlr_kernel(wb_ref, x_ref, o_ref):
    # wb_ref: SMEM (3,)  = [w0*ln2, w1*ln2, b*ln2]
    # x_ref : VMEM (tr, 256)  row r, lanes (2j, 2j+1) = features of batch elem 128*r + j
    # o_ref : VMEM (tr, 128)  out[r, j] = 2 ** fc(x)  for batch elem 128*r + j
    w0 = wb_ref[0]
    w1 = wb_ref[1]
    b = wb_ref[2]

    # (256, 128) de-interleave + weight matrix: sel[2j, j] = w0*ln2, sel[2j+1, j] = w1*ln2.
    # Built per grid step from SMEM scalars — a handful of VPU ops on 32 vregs,
    # negligible against the HBM-bound tile work.
    row = lax.broadcasted_iota(jnp.int32, (_PAIR, _LANE), 0)
    col = lax.broadcasted_iota(jnp.int32, (_PAIR, _LANE), 1)
    sel = jnp.where(row == 2 * col, w0,
                    jnp.where(row == 2 * col + 1, w1, 0.0))

    # MXU does the lane de-interleave + dot in one pass (idle unit in this kernel).
    dp = jnp.dot(x_ref[...], sel, preferred_element_type=jnp.float32) + b
    o_ref[...] = jnp.exp(dp)          # exp(ln2 * fc(x)) == 2 ** fc(x), EUP slot


def _round_up(n, m):
    return ((n + m - 1) // m) * m


def _hlr_forward_impl(x, weight, bias):
    """Pallas implementation of HLR.forward.

    Args:
      x:      (B, 2) float32
      weight: (1, 2) float32   (nn.Linear.weight)
      bias:   (1,)   float32   (nn.Linear.bias)
    Returns:
      (out, None) where out is (B, 1) float32 = 2 ** (x @ W^T + b)
    """
    x = x.astype(jnp.float32)
    B = x.shape[0]

    R = pl.cdiv(B, _LANE)          # packed rows of 128 batch elements
    B_row = R * _LANE

    # Tile rows: multiple of 8, capped at _MAX_TILE_ROWS, and >= 2 grid steps
    # whenever there is enough work (v7x megacore).  Ragged last blocks are
    # handled by Pallas (padded reads / masked writes), so no row padding.
    n_steps = pl.cdiv(R, _MAX_TILE_ROWS)
    if n_steps < 2 and R > _SUB:
        n_steps = 2
    tr = min(_MAX_TILE_ROWS, max(_SUB, _round_up(pl.cdiv(R, n_steps), _SUB)))
    grid_n = pl.cdiv(R, tr)

    # Only wrapper-side copy: pad the batch to a 128 multiple (skipped if aligned).
    if B_row != B:
        x = jnp.pad(x, ((0, B_row - B), (0, 0)))
    x2d = x.reshape(R, _PAIR)      # free row-major reshape — NO transpose pass

    ln2 = math.log(2.0)
    wb = (jnp.concatenate([weight.reshape(-1), bias.reshape(-1)])
          .astype(jnp.float32) * ln2)               # (3,) = [w0, w1, b] * ln2

    out2d = pl.pallas_call(
        _hlr_kernel,
        out_shape=jax.ShapeDtypeStruct((R, _LANE), jnp.float32),
        grid=(grid_n,),
        in_specs=[
            pl.BlockSpec(memory_space=pltpu.SMEM),            # wb scalars
            pl.BlockSpec((tr, _PAIR), lambda i: (i, 0)),      # x row tiles
        ],
        out_specs=pl.BlockSpec((tr, _LANE), lambda i: (i, 0)),
        compiler_params=pltpu.CompilerParams(
            dimension_semantics=("parallel",)),               # v7x: split over 2 TCs
    )(wb, x2d)

    out = out2d.reshape(B_row)[:B].reshape(B, 1)
    return out, None


hlr_forward = jax.jit(_hlr_forward_impl)


if __name__ == "__main__":
    key = jax.random.PRNGKey(0)
    kx, kw, kb = jax.random.split(key, 3)

    # Deterministic nn.Linear(2, 1)-style init: U(-1/sqrt(2), 1/sqrt(2))
    bound = 1.0 / math.sqrt(2.0)
    weight = jax.random.uniform(kw, (1, 2), minval=-bound, maxval=bound,
                                dtype=jnp.float32)
    bias = jax.random.uniform(kb, (1,), minval=-bound, maxval=bound,
                              dtype=jnp.float32)

    # B=8   : tiny spec-like case (single small block)
    # B=300 : R < 8 (oversized block + batch padding)
    # B=2049: multi-step parallel grid + ragged last block
    for B in (8, 300, 2049):
        xb = jax.random.normal(jax.random.fold_in(kx, B), (B, 2),
                               dtype=jnp.float32)
        out, aux = hlr_forward(xb, weight, bias)
        out = jax.block_until_ready(out)

        # Precision-unambiguous elementwise f32 reference (no XLA dot involved).
        dp_ref = xb[:, 0:1] * weight[0, 0] + xb[:, 1:2] * weight[0, 1] + bias
        ref = 2.0 ** dp_ref

        assert aux is None
        assert out.shape == (B, 1)
        assert jnp.allclose(out, ref, rtol=1e-5, atol=1e-6), (
            f"mismatch at B={B}: max abs err "
            f"{float(jnp.max(jnp.abs(out - ref)))}")

    print("KERNEL_OK")
</pallas_src>

<mosaic_0001>
module attributes {stable_mosaic.version = 11 : i64} {
  func.func @_hlr_kernel(%arg0: i32, %arg1: memref<3xf32, #tpu.memory_space<smem>>, %arg2: memref<8x256xf32, #tpu.memory_space<vmem>>, %arg3: memref<8x128xf32, #tpu.memory_space<vmem>>) attributes {dimension_semantics = [#tpu.dimension_semantics<parallel>], iteration_bounds = array<i64: 1>, scalar_prefetch = 0 : i64, scratch_operands = 0 : i64, tpu.core_type = #tpu.core_type<tc>, window_params = [{transform_indices = @transform_0, window_bounds = array<i64: 3>}, {transform_indices = @transform_1, window_bounds = array<i64: 8, 256>}, {transform_indices = @transform_2, window_bounds = array<i64: 8, 128>}]} {
    %c0 = arith.constant 0 : index
    %0 = memref.load %arg1[%c0] : memref<3xf32, #tpu.memory_space<smem>>
    %c1 = arith.constant 1 : index
    %1 = memref.load %arg1[%c1] : memref<3xf32, #tpu.memory_space<smem>>
    %c2 = arith.constant 2 : index
    %2 = memref.load %arg1[%c2] : memref<3xf32, #tpu.memory_space<smem>>
    %3 = tpu.iota {dimensions = array<i32: 0>} : vector<256x128xi32>
    %4 = tpu.iota {dimensions = array<i32: 1>} : vector<256x128xi32>
    %c2_i32 = arith.constant 2 : i32
    %5 = vector.broadcast %c2_i32 : i32 to vector<256x128xi32>
    %6 = arith.muli %5, %4 : vector<256x128xi32>
    %7 = arith.cmpi eq, %3, %6 : vector<256x128xi32>
    %c2_i32_0 = arith.constant 2 : i32
    %8 = vector.broadcast %c2_i32_0 : i32 to vector<256x128xi32>
    %9 = arith.muli %8, %4 : vector<256x128xi32>
    %c1_i32 = arith.constant 1 : i32
    %10 = vector.broadcast %c1_i32 : i32 to vector<256x128xi32>
    %11 = arith.addi %9, %10 : vector<256x128xi32>
    %12 = arith.cmpi eq, %3, %11 : vector<256x128xi32>
    %cst = arith.constant 0.000000e+00 : f32
    %13 = vector.broadcast %1 : f32 to vector<256x128xf32>
    %14 = vector.broadcast %cst : f32 to vector<256x128xf32>
    %15 = arith.select %12, %13, %14 : vector<256x128xi1>, vector<256x128xf32>
    %16 = vector.broadcast %0 : f32 to vector<256x128xf32>
    %17 = arith.select %7, %16, %15 : vector<256x128xi1>, vector<256x128xf32>
    %c0_1 = arith.constant 0 : index
    %c0_2 = arith.constant 0 : index
    %18 = vector.load %arg2[%c0_1, %c0_2] : memref<8x256xf32, #tpu.memory_space<vmem>>, vector<8x256xf32>
    %cst_3 = arith.constant dense<0.000000e+00> : vector<8x128xf32>
    %19 = tpu.matmul %18, %17, %cst_3 {dimension_numbers = #tpu.dot_dimension_numbers<[1], [0], [0], [1], [0, 0, 1, 1], [], []>} : vector<8x256xf32>, vector<256x128xf32>, vector<8x128xf32> -> vector<8x128xf32>
    %20 = vector.broadcast %2 : f32 to vector<8x128xf32>
    %21 = arith.addf %19, %20 : vector<8x128xf32>
    %22 = math.exp %21 : vector<8x128xf32>
    %c0_4 = arith.constant 0 : index
    %c0_5 = arith.constant 0 : index
    %23 = vector.load %arg3[%c0_4, %c0_5] : memref<8x128xf32, #tpu.memory_space<vmem>>, vector<8x128xf32>
    tpu.vector_store %arg3[%c0_4, %c0_5], %22 {strides = array<i32>} : memref<8x128xf32, #tpu.memory_space<vmem>>, vector<8x128xf32>,
    return
  }
  func.func @transform_0(%arg0: i32) -> i32 {
    %c0_i32 = arith.constant 0 : i32
    %c0_i32_0 = arith.constant 0 : i32
    return %c0_i32 : i32
  }
  func.func @transform_1(%arg0: i32) -> (i32, i32) {
    %c0_i32 = arith.constant 0 : i32
    %c0_i32_0 = arith.constant 0 : i32
    return %arg0, %c0_i32 : i32, i32
  }
  func.func @transform_2(%arg0: i32) -> (i32, i32) {
    %c0_i32 = arith.constant 0 : i32
    %c0_i32_0 = arith.constant 0 : i32
    return %arg0, %c0_i32 : i32, i32
  }
}

</mosaic_0001>

<llo_original>
// kernel: _hlr_forward_impl.1
$region0: #{_hlr_forward_impl.1}
  #allocation0 [shape = 'u32[]', space=smem, size = 0x4, offset = 0x4, fixed_abs, tag = 'smem constant byte address 0x4 - core index']
  #allocation1 [shape = 'u32[144,128]{1,0:T(1,128)}', space=vmem, size = 0x12000, scoped, tag = 'internal scratch']
  %s0 = inlined_call_operand.vmem [shape: f32[3], index: 0, kind: input, shape index: {}]
  %s1 = inlined_call_operand.vmem [shape: f32[1,256], index: 1, kind: input, shape index: {}]
  %s2 = inlined_call_operand.vmem [shape: f32[1,128], index: 2, kind: output, shape index: {}]
  %s3 = sld [smem:[#allocation0]]
  $region52: #{_hlr_forward_impl.1} parent=0
    _
  %s5 = ssub.s32 1, %s3
  %s6 = scalar_select 0, %s5, %s3
  $region1: #{_hlr_forward_impl.1} parent=0
    #allocation2 [shape = 'u8[512]{0}', space=smem, size = 0x200, scoped, tag = 'input window, operand 0, single buffered']
    #allocation3 [shape = 's32[1]{0}', space=sflag, size = 0x4, scoped, tag = 'scoped memory for _hlr_forward_impl.1']
    #allocation4 [shape = 'u8[4096]{0}', space=vmem, size = 0x1000, scoped, tag = 'output window, operand 0, single buffered']
    %7 = vsyncpa [#allocation3], 0
    // Predicated region
    $region2: #{_hlr_forward_impl.1} parent=1 // pred_check
      _
    $region3: #{_hlr_forward_impl.1} parent=1 // pred_check_branch
      %9 = sbr.rel (0) target = $region5
    $region4: #{_hlr_forward_impl.1} parent=1 // pred_region
      %s11 = ssub.s32 16, 16
      %12 = vsyncadd [#allocation3], %s11
      %s14 = sshll.u32 %s0, 4
      %s15 = int_to_ptr.vmem [resolvable:$true] %s14
      %17 = dma.vmem_to_smem %s15, 16, [#allocation2], [#allocation3]
    $region5: #{_hlr_forward_impl.1} parent=1 // pred_fallthru
      _
    // Predicated region
    $region6: #{_hlr_forward_impl.1} parent=1 // pred_check
      _
    $region7: #{_hlr_forward_impl.1} parent=1 // pred_check_branch
      %19 = sbr.rel (0) target = $region9
    $region8: #{_hlr_forward_impl.1} parent=1 // pred_region
      _
    $region9: #{_hlr_forward_impl.1} parent=1 // pred_fallthru
      _
    // Predicated region
    $region10: #{_hlr_forward_impl.1} parent=1 // pred_check
      _
    $region11: #{_hlr_forward_impl.1} parent=1 // pred_check_branch
      %21 = sbr.rel (0) target = $region13
    $region12: #{_hlr_forward_impl.1} parent=1 // pred_region
      %22 = dma.done [#allocation3], 16
    $region13: #{_hlr_forward_impl.1} parent=1 // pred_fallthru
      _
    %23 = sfence
    %s24 = sld [smem:[#allocation2]]
    %s25 = sld [smem:[#allocation2 + $0x1]]
    %s26 = sld [smem:[#allocation2 + $0x2]]
    %v27 = vlaneseq
    %v28 = vshrl.u32 %v27, 7
    %v29 = vadd.s32 %v28, 8
    %v30 = vadd.s32 %v28, 16
    %v31 = vadd.s32 %v28, 24
    %v32 = vadd.s32 %v28, 32
    %v33 = vadd.s32 %v28, 40
    %v34 = vadd.s32 %v28, 48
    %v35 = vadd.s32 %v28, 56
    %v36 = vadd.s32 %v28, 64
    %v37 = vadd.s32 %v28, 72
    %v38 = vadd.s32 %v28, 80
    %v39 = vadd.s32 %v28, 88
    %v40 = vadd.s32 %v28, 96
    %v41 = vadd.s32 %v28, 104
    %v42 = vadd.s32 %v28, 112
    %v43 = vadd.s32 %v28, 120
    %v44 = vadd.s32 %v28, 128
    %v45 = vadd.s32 %v28, 136
    %v46 = vadd.s32 %v28, 144
    %v47 = vadd.s32 %v28, 152
    %v48 = vadd.s32 %v28, 160
    %v49 = vadd.s32 %v28, 168
    %v50 = vadd.s32 %v28, 176
    %v51 = vadd.s32 %v28, 184
    %v52 = vadd.s32 %v28, 192
    %v53 = vadd.s32 %v28, 200
    %v54 = vadd.s32 %v28, 208
    %v55 = vadd.s32 %v28, 216
    %v56 = vadd.s32 %v28, 224
    %v57 = vadd.s32 %v28, 232
    %v58 = vadd.s32 %v28, 240
    %v59 = vadd.s32 %v28, 248
    %v60 = vlaneseq
    %v61 = vand.u32 %v60, 127
    %v62 = vmul.u32 %v61, 2
    %vm63 = vcmp.eq.s32.totalorder %v28, %v62
    %vm64 = vcmp.eq.s32.totalorder %v29, %v62
    %vm65 = vcmp.eq.s32.totalorder %v30, %v62
    %vm66 = vcmp.eq.s32.totalorder %v31, %v62
    %vm67 = vcmp.eq.s32.totalorder %v32, %v62
    %vm68 = vcmp.eq.s32.totalorder %v33, %v62
    %vm69 = vcmp.eq.s32.totalorder %v34, %v62
    %vm70 = vcmp.eq.s32.totalorder %v35, %v62
    %vm71 = vcmp.eq.s32.totalorder %v36, %v62
    %vm72 = vcmp.eq.s32.totalorder %v37, %v62
    %vm73 = vcmp.eq.s32.totalorder %v38, %v62
    %vm74 = vcmp.eq.s32.totalorder %v39, %v62
    %vm75 = vcmp.eq.s32.totalorder %v40, %v62
    %vm76 = vcmp.eq.s32.totalorder %v41, %v62
    %vm77 = vcmp.eq.s32.totalorder %v42, %v62
    %vm78 = vcmp.eq.s32.totalorder %v43, %v62
    %vm79 = vcmp.eq.s32.totalorder %v44, %v62
    %vm80 = vcmp.eq.s32.totalorder %v45, %v62
    %vm81 = vcmp.eq.s32.totalorder %v46, %v62
    %vm82 = vcmp.eq.s32.totalorder %v47, %v62
    %vm83 = vcmp.eq.s32.totalorder %v48, %v62
    %vm84 = vcmp.eq.s32.totalorder %v49, %v62
    %vm85 = vcmp.eq.s32.totalorder %v50, %v62
    %vm86 = vcmp.eq.s32.totalorder %v51, %v62
    %vm87 = vcmp.eq.s32.totalorder %v52, %v62
    %vm88 = vcmp.eq.s32.totalorder %v53, %v62
    %vm89 = vcmp.eq.s32.totalorder %v54, %v62
    %vm90 = vcmp.eq.s32.totalorder %v55, %v62
    %vm91 = vcmp.eq.s32.totalorder %v56, %v62
    %vm92 = vcmp.eq.s32.totalorder %v57, %v62
    %vm93 = vcmp.eq.s32.totalorder %v58, %v62
    %vm94 = vcmp.eq.s32.totalorder %v59, %v62
    %v95 = vadd.s32 %v62, 1
    %vm96 = vcmp.eq.s32.totalorder %v28, %v95
    %vm97 = vcmp.eq.s32.totalorder %v29, %v95
    %vm98 = vcmp.eq.s32.totalorder %v30, %v95
    %vm99 = vcmp.eq.s32.totalorder %v31, %v95
    %vm100 = vcmp.eq.s32.totalorder %v32, %v95
    %vm101 = vcmp.eq.s32.totalorder %v33, %v95
    %vm102 = vcmp.eq.s32.totalorder %v34, %v95
    %vm103 = vcmp.eq.s32.totalorder %v35, %v95
    %vm104 = vcmp.eq.s32.totalorder %v36, %v95
    %vm105 = vcmp.eq.s32.totalorder %v37, %v95
    %vm106 = vcmp.eq.s32.totalorder %v38, %v95
    %vm107 = vcmp.eq.s32.totalorder %v39, %v95
    %vm108 = vcmp.eq.s32.totalorder %v40, %v95
    %vm109 = vcmp.eq.s32.totalorder %v41, %v95
    %vm110 = vcmp.eq.s32.totalorder %v42, %v95
    %vm111 = vcmp.eq.s32.totalorder %v43, %v95
    %vm112 = vcmp.eq.s32.totalorder %v44, %v95
    %vm113 = vcmp.eq.s32.totalorder %v45, %v95
    %vm114 = vcmp.eq.s32.totalorder %v46, %v95
    %vm115 = vcmp.eq.s32.totalorder %v47, %v95
    %vm116 = vcmp.eq.s32.totalorder %v48, %v95
    %vm117 = vcmp.eq.s32.totalorder %v49, %v95
    %vm118 = vcmp.eq.s32.totalorder %v50, %v95
    %vm119 = vcmp.eq.s32.totalorder %v51, %v95
    %vm120 = vcmp.eq.s32.totalorder %v52, %v95
    %vm121 = vcmp.eq.s32.totalorder %v53, %v95
    %vm122 = vcmp.eq.s32.totalorder %v54, %v95
    %vm123 = vcmp.eq.s32.totalorder %v55, %v95
    %vm124 = vcmp.eq.s32.totalorder %v56, %v95
    %vm125 = vcmp.eq.s32.totalorder %v57, %v95
    %vm126 = vcmp.eq.s32.totalorder %v58, %v95
    %vm127 = vcmp.eq.s32.totalorder %v59, %v95
    %v128 = vstv %s25
    %v129 = vsel %vm96, %v128, 0.0
    %v130 = vsel %vm97, %v128, 0.0
    %v131 = vsel %vm98, %v128, 0.0
    %v132 = vsel %vm99, %v128, 0.0
    %v133 = vsel %vm100, %v128, 0.0
    %v134 = vsel %vm101, %v128, 0.0
    %v135 = vsel %vm102, %v128, 0.0
    %v136 = vsel %vm103, %v128, 0.0
    %v137 = vsel %vm104, %v128, 0.0
    %v138 = vsel %vm105, %v128, 0.0
    %v139 = vsel %vm106, %v128, 0.0
    %v140 = vsel %vm107, %v128, 0.0
    %v141 = vsel %vm108, %v128, 0.0
    %v142 = vsel %vm109, %v128, 0.0
    %v143 = vsel %vm110, %v128, 0.0
    %v144 = vsel %vm111, %v128, 0.0
    %v145 = vsel %vm112, %v128, 0.0
    %v146 = vsel %vm113, %v128, 0.0
    %v147 = vsel %vm114, %v128, 0.0
    %v148 = vsel %vm115, %v128, 0.0
    %v149 = vsel %vm116, %v128, 0.0
    %v150 = vsel %vm117, %v128, 0.0
    %v151 = vsel %vm118, %v128, 0.0
    %v152 = vsel %vm119, %v128, 0.0
    %v153 = vsel %vm120, %v128, 0.0
    %v154 = vsel %vm121, %v128, 0.0
    %v155 = vsel %vm122, %v128, 0.0
    %v156 = vsel %vm123, %v128, 0.0
    %v157 = vsel %vm124, %v128, 0.0
    %v158 = vsel %vm125, %v128, 0.0
    %v159 = vsel %vm126, %v128, 0.0
    %v160 = vsel %vm127, %v128, 0.0
    %v161 = vstv %s24
    %v162 = vsel %vm63, %v161, %v129
    %v163 = vsel %vm64, %v161, %v130
    %v164 = vsel %vm65, %v161, %v131
    %v165 = vsel %vm66, %v161, %v132
    %v166 = vsel %vm67, %v161, %v133
    %v167 = vsel %vm68, %v161, %v134
    %v168 = vsel %vm69, %v161, %v135
    %v169 = vsel %vm70, %v161, %v136
    %v170 = vsel %vm71, %v161, %v137
    %v171 = vsel %vm72, %v161, %v138
    %v172 = vsel %vm73, %v161, %v139
    %v173 = vsel %vm74, %v161, %v140
    %v174 = vsel %vm75, %v161, %v141
    %v175 = vsel %vm76, %v161, %v142
    %v176 = vsel %vm77, %v161, %v143
    %v177 = vsel %vm78, %v161, %v144
    %v178 = vsel %vm79, %v161, %v145
    %v179 = vsel %vm80, %v161, %v146
    %v180 = vsel %vm81, %v161, %v147
    %v181 = vsel %vm82, %v161, %v148
    %v182 = vsel %vm83, %v161, %v149
    %v183 = vsel %vm84, %v161, %v150
    %v184 = vsel %vm85, %v161, %v151
    %v185 = vsel %vm86, %v161, %v152
    %v186 = vsel %vm87, %v161, %v153
    %v187 = vsel %vm88, %v161, %v154
    %v188 = vsel %vm89, %v161, %v155
    %v189 = vsel %vm90, %v161, %v156
    %v190 = vsel %vm91, %v161, %v157
    %v191 = vsel %vm92, %v161, %v158
    %v192 = vsel %vm93, %v161, %v159
    %v193 = vsel %vm94, %v161, %v160
    %v194 = vld [vmem:[%s1] sm:$0x3]
    %v195 = vld [vmem:[%s1 + $0x2] sm:$0x3]
    %v196 = vld [vmem:[%s1 + $0x4] sm:$0x3]
    %v197 = vld [vmem:[%s1 + $0x6] sm:$0x3]
    %v198 = vld [vmem:[%s1 + $0x8] sm:$0x3]
    %v199 = vld [vmem:[%s1 + $0xa] sm:$0x3]
    %v200 = vld [vmem:[%s1 + $0xc] sm:$0x3]
    %v201 = vld [vmem:[%s1 + $0xe] sm:$0x3]
    %v202 = vstv %s26
    %v211 = vcombine.low %v194, %v195
    %v212 = vcombine.low %v196, %v197
    %v213 = vcombine.low %v198, %v199
    %v214 = vcombine.low %v200, %v201
    %v216 = vunpack.c.l.s4 1966171168
    %v217 = vunpack.c.0.s8 %v216
    %v218 = vlaneseq
    %v219 = vshrl.u32 %v218, 7
    %v220 = vsub.s32 %v217, %v219
    %v221 = vrot.slane %v211, %v220
    %v223 = vunpack.c.l.s4 1966171168
    %v224 = vunpack.c.0.s8 %v223
    %v225 = vlaneseq
    %v226 = vshrl.u32 %v225, 7
    %v227 = vsub.s32 %v224, %v226
    %v228 = vrot.slane %v212, %v227
    %v230 = vunpack.c.l.s4 1966171168
    %v231 = vunpack.c.0.s8 %v230
    %v232 = vlaneseq
    %v233 = vshrl.u32 %v232, 7
    %v234 = vsub.s32 %v231, %v233
    %v235 = vrot.slane %v213, %v234
    %v237 = vunpack.c.l.s4 1966171168
    %v238 = vunpack.c.0.s8 %v237
    %v239 = vlaneseq
    %v240 = vshrl.u32 %v239, 7
    %v241 = vsub.s32 %v238, %v240
    %v242 = vrot.slane %v214, %v241
    %v243 = vcombine.low %v221, %v228
    %v244 = vcombine.high %v221, %v228
    %v245 = vcombine.low %v235, %v242
    %v246 = vcombine.high %v235, %v242
    %v248 = vunpack.c.l.s4 1966171168
    %v249 = vunpack.c.0.s8 %v248
    %v250 = vlaneseq
    %v251 = vshrl.u32 %v250, 7
    %v252 = vsub.s32 %v249, %v251
    %v253 = vrot.slane %v243, %v252
    %v255 = vunpack.c.l.s4 1966171168
    %v256 = vunpack.c.0.s8 %v255
    %v257 = vlaneseq
    %v258 = vshrl.u32 %v257, 7
    %v259 = vsub.s32 %v256, %v258
    %v260 = vrot.slane %v244, %v259
    %v262 = vunpack.c.l.s4 1966171168
    %v263 = vunpack.c.0.s8 %v262
    %v264 = vlaneseq
    %v265 = vshrl.u32 %v264, 7
    %v266 = vsub.s32 %v263, %v265
    %v267 = vrot.slane %v245, %v266
    %v269 = vunpack.c.l.s4 1966171168
    %v270 = vunpack.c.0.s8 %v269
    %v271 = vlaneseq
    %v272 = vshrl.u32 %v271, 7
    %v273 = vsub.s32 %v270, %v272
    %v274 = vrot.slane %v246, %v273
    %v275 = vcombine.low %v253, %v267
    %v276 = vcombine.low %v260, %v274
    %279 = vmatprep.subr.mxu0 0.0
    %280 = vmatpush1.msra.mxu0 %v162
    %281 = vmatprep.subr.mxu0 0.0
    %282 = vmatpush1.msra.mxu0 %v163
    %283 = vmatprep.subr.mxu0 0.0
    %284 = vmatpush1.msra.mxu0 %v164
    %285 = vmatprep.subr.mxu0 0.0
    %286 = vmatpush1.msra.mxu0 %v165
    %287 = vmatprep.subr.mxu0 0.0
    %288 = vmatpush1.msra.mxu0 %v166
    %289 = vmatprep.subr.mxu0 0.0
    %290 = vmatpush1.msra.mxu0 %v167
    %291 = vmatprep.subr.mxu0 0.0
    %292 = vmatpush1.msra.mxu0 %v168
    %293 = vmatprep.subr.mxu0 0.0
    %294 = vmatpush1.msra.mxu0 %v169
    %295 = vmatprep.subr.mxu0 0.0
    %296 = vmatpush1.msra.mxu0 %v170
    %297 = vmatprep.subr.mxu0 0.0
    %298 = vmatpush1.msra.mxu0 %v171
    %299 = vmatprep.subr.mxu0 0.0
    %300 = vmatpush1.msra.mxu0 %v172
    %301 = vmatprep.subr.mxu0 0.0
    %302 = vmatpush1.msra.mxu0 %v173
    %303 = vmatprep.subr.mxu0 0.0
    %304 = vmatpush1.msra.mxu0 %v174
    %305 = vmatprep.subr.mxu0 0.0
    %306 = vmatpush1.msra.mxu0 %v175
    %307 = vmatprep.subr.mxu0 0.0
    %308 = vmatpush1.msra.mxu0 %v176
    %309 = vmatprep.subr.mxu0 0.0
    %310 = vmatpush1.msra.mxu0 %v177
    %311 = vmatprep.subr.mxu0 0.0
    %312 = vmatpush1.msra.mxu0 %v178
    %313 = vmatprep.subr.mxu0 0.0
    %314 = vmatpush1.msra.mxu0 %v179
    %315 = vmatprep.subr.mxu0 0.0
    %316 = vmatpush1.msra.mxu0 %v180
    %317 = vmatprep.subr.mxu0 0.0
    %318 = vmatpush1.msra.mxu0 %v181
    %319 = vmatprep.subr.mxu0 0.0
    %320 = vmatpush1.msra.mxu0 %v182
    %321 = vmatprep.subr.mxu0 0.0
    %322 = vmatpush1.msra.mxu0 %v183
    %323 = vmatprep.subr.mxu0 0.0
    %324 = vmatpush1.msra.mxu0 %v184
    %325 = vmatprep.subr.mxu0 0.0
    %326 = vmatpush1.msra.mxu0 %v185
    %327 = vmatprep.subr.mxu0 0.0
    %328 = vmatpush1.msra.mxu0 %v186
    %329 = vmatprep.subr.mxu0 0.0
    %330 = vmatpush1.msra.mxu0 %v187
    %331 = vmatprep.subr.mxu0 0.0
    %332 = vmatpush1.msra.mxu0 %v188
    %333 = vmatprep.subr.mxu0 0.0
    %334 = vmatpush1.msra.mxu0 %v189
    %335 = vmatprep.subr.mxu0 0.0
    %336 = vmatpush1.msra.mxu0 %v190
    %337 = vmatprep.subr.mxu0 0.0
    %338 = vmatpush1.msra.mxu0 %v191
    %339 = vmatprep.subr.mxu0 0.0
    %340 = vmatpush1.msra.mxu0 %v192
    %341 = vmatprep.subr.mxu0 0.0
    %342 = vmatpush1.msra.mxu0 %v193
    %343 = vmatprep.mubr.f32.mxu0 %v276
    %344 = vmatmul.mubr.f32.gmra.mrb[0].mxu0 %v275
    %v345 = vpop.f32.mrb[0].mxu0
    %v346 = vadd.f32 %v202, %v345
    %v347 = vpop.f32.mrb[0].mxu0
    %348 = vdwg.mxu0
    %v349 = vmul.f32 %v346, 1.442695
    %v350 = vpow.pop %v349
    %351 = vst [vmem:[#allocation4] sm:$0xff] %v350
    // Predicated region
    $region14: #{_hlr_forward_impl.1} parent=1 // pred_check
      _
    $region15: #{_hlr_forward_impl.1} parent=1 // pred_check_branch
      %353 = sbr.rel (0) target = $region17
    $region16: #{_hlr_forward_impl.1} parent=1 // pred_region
      // Predicated region
      $region18: #{_hlr_forward_impl.1} parent=16 // pred_check
        _
      $region19: #{_hlr_forward_impl.1} parent=16 // pred_check_branch
        %355 = sbr.rel (0) target = $region21
      $region20: #{_hlr_forward_impl.1} parent=16 // pred_region
        // Predicated region
        $region22: #{_hlr_forward_impl.1} parent=20 // pred_check
          _
        $region23: #{_hlr_forward_impl.1} parent=20 // pred_check_branch
          %357 = sbr.rel target = $region25
        $region24: #{_hlr_forward_impl.1} parent=20 // pred_region
          // Predicated region
          $region37: #{_hlr_forward_impl.1} parent=24 // pred_check
            _
          $region38: #{_hlr_forward_impl.1} parent=24 // pred_check_branch
            %372 = sbr.rel (0) target = $region40
          $region39: #{_hlr_forward_impl.1} parent=24 // pred_region
            loop: start=0, step=1, limit=1
            $region41: #{_hlr_forward_impl.1} parent=39 // loop_pre_header
              _
            $region42: #{_hlr_forward_impl.1} parent=39 // loop_header
              %s375 = sphi 0, %s379
              %p376 = scmp.ge.s32.totalorder %s375, 1
              %s380 = sphi [#allocation4], [#allocation4]
              %s381 = sphi %s2, %s2
            $region43: #{_hlr_forward_impl.1} parent=39 // loop_header_branch
              %378 = sbr.rel (%p376) target = $region47
            $region44: #{_hlr_forward_impl.1} parent=39 // loop_body
              %v382 = vld [vmem:[%s380] sm:$0x1]
              %383 = vst [vmem:[%s381] sm:$0x1] %v382
            $region45: #{_hlr_forward_impl.1} parent=39 // loop_footer
              %s379 = sadd.s32 1, %s375
            $region46: #{_hlr_forward_impl.1} parent=39 // loop_footer_branch
              %374 = sbr.rel target = $region42
            $region47: #{_hlr_forward_impl.1} parent=39 // loop_exit
              _
          $region40: #{_hlr_forward_impl.1} parent=24 // pred_fallthru
            _
        $region25: #{_hlr_forward_impl.1} parent=20 // pred_fallthru
          _
        // Predicated region
        $region26: #{_hlr_forward_impl.1} parent=20 // pred_check
          _
        $region27: #{_hlr_forward_impl.1} parent=20 // pred_check_branch
          %359 = sbr.rel (0) target = $region29
        $region28: #{_hlr_forward_impl.1} parent=20 // pred_region
          loop: start=0, step=1, limit=1
          $region30: #{_hlr_forward_impl.1} parent=28 // loop_pre_header
            _
          $region31: #{_hlr_forward_impl.1} parent=28 // loop_header
            %s362 = sphi 0, %s366
            %p363 = scmp.ge.s32.totalorder %s362, 1
            %s367 = sphi [#allocation4], [#allocation4]
            %s368 = sphi %s2, %s2
          $region32: #{_hlr_forward_impl.1} parent=28 // loop_header_branch
            %365 = sbr.rel (%p363) target = $region36
          $region33: #{_hlr_forward_impl.1} parent=28 // loop_body
            %v369 = vld [vmem:[%s367] sm:$0x1]
            %370 = vst [vmem:[%s368] sm:$0x1] %v369
          $region34: #{_hlr_forward_impl.1} parent=28 // loop_footer
            %s366 = sadd.s32 1, %s362
          $region35: #{_hlr_forward_impl.1} parent=28 // loop_footer_branch
            %361 = sbr.rel target = $region31
          $region36: #{_hlr_forward_impl.1} parent=28 // loop_exit
            _
        $region29: #{_hlr_forward_impl.1} parent=20 // pred_fallthru
          _
      $region21: #{_hlr_forward_impl.1} parent=16 // pred_fallthru
        _
      %384 = vnop
    $region17: #{_hlr_forward_impl.1} parent=1 // pred_fallthru
      _
    // Predicated region
    $region48: #{_hlr_forward_impl.1} parent=1 // pred_check
      _
    $region49: #{_hlr_forward_impl.1} parent=1 // pred_check_branch
      %386 = sbr.rel (0) target = $region51
    $region50: #{_hlr_forward_impl.1} parent=1 // pred_region
      _
    $region51: #{_hlr_forward_impl.1} parent=1 // pred_fallthru
      _
    %387 = vsyncpa [#allocation3], 1

</llo_original>
